<compile_context>
chip_gen: v7x
topology: tpu7x:2x2x1
jax: 0.10.0
libtpu: 0.0.40
codegen_flags: <defaults>
</compile_context>

<pallas_src>
import functools

import numpy as np
import jax
import jax.numpy as jnp
from jax.experimental import pallas as pl
from jax.experimental.pallas import tpu as pltpu


def _tbb_kernel(*refs, K, stride, pad, res_mode):
    """Fused temporal conv + BN + residual adds + ReLU for one batch block.

    refs (by res_mode):
      "none"/"identity": x, w, bias, res_module, out, acc
      "downsample":      x, w, bias, w_res, bias_res, res_module, out, acc
    x is [Bn, T, V, C] channels-last (C on lanes, V on sublanes).
    """
    if res_mode == "downsample":
        x_ref, w_ref, b_ref, wr_ref, br_ref, rm_ref, o_ref, acc_ref = refs
    else:
        x_ref, w_ref, b_ref, rm_ref, o_ref, acc_ref = refs

    B, T_out, V, C = o_ref.shape
    T = x_ref.shape[1]

    # ---- temporal (K,1) conv as K channel-mixing MXU matmuls -----------------
    # Output frame t consumes input frame i = t*stride + k - pad for tap k.
    # All bounds are static Python ints, so every slice below is static.
    taps = [pad] + [k for k in range(K) if k != pad]   # center tap first (full range)
    first = True
    for k in taps:
        t_lo = 0 if pad - k <= 0 else -(-(pad - k) // stride)     # ceil((pad-k)/stride)
        t_hi = min(T_out, (T - 1 - k + pad) // stride + 1)
        if t_hi <= t_lo:
            continue
        t_len = t_hi - t_lo
        i_lo = t_lo * stride + k - pad
        if stride == 1:
            xk = x_ref[:, i_lo:i_lo + t_len]                      # [B, t_len, V, C]
        else:
            xk = x_ref[:, pl.ds(i_lo, t_len, stride=stride)]      # strided temporal taps
        part = jnp.dot(xk.reshape(B * t_len * V, C), w_ref[k],
                       preferred_element_type=jnp.float32,
                       ).reshape(B, t_len, V, C)
        if first:
            if t_lo == 0 and t_hi == T_out:
                acc_ref[...] = part                               # init from center tap
            else:
                acc_ref[...] = jnp.zeros_like(acc_ref)
                acc_ref[:, t_lo:t_hi] += part
            first = False
        else:
            acc_ref[:, t_lo:t_hi] += part
    if first:                                                     # degenerate: no valid tap
        acc_ref[...] = jnp.zeros_like(acc_ref)

    # ---- fused BN (scale pre-folded into w) + residuals + ReLU ---------------
    y = acc_ref[...] + b_ref[...]                                 # [B,T_out,V,C] + [1,C]
    y = y + rm_ref[...].astype(jnp.float32)                       # external residual module
    if res_mode == "identity":
        y = y + x_ref[...].astype(jnp.float32)                    # stride==1 -> T == T_out
    elif res_mode == "downsample":
        # 1x1 conv with temporal stride + BN (scale folded into wr, bias in br),
        # operating on the strided slice of the already-loaded x block.
        if stride == 1:
            xr = x_ref[:, :T_out]
        else:
            xr = x_ref[:, pl.ds(0, T_out, stride=stride)]
        yr = jnp.dot(xr.reshape(B * T_out * V, C), wr_ref[...],
                     preferred_element_type=jnp.float32,
                     ).reshape(B, T_out, V, C)
        y = y + (yr + br_ref[...])
    o_ref[...] = jnp.maximum(y, 0.0).astype(o_ref.dtype)


def _pick_block_n(N, T, T_out, V, C):
    """Samples per grid step: biggest block that fits a conservative VMEM budget
    (sized for v7x's 64 MiB physical / 32 MiB scoped VMEM with double-buffered
    pipelining), keeps >=2 grid steps for megacore sharding, and divides N."""
    per = (2 * (T * V * C * 2            # x block, bf16, double-buffered
                + T_out * V * C * 2      # res_module block, bf16, double-buffered
                + T_out * V * C * 4)     # output block, f32, double-buffered
           + T_out * V * C * 4)          # f32 accumulator scratch
    b = max(1, min(N, (12 * 1024 * 1024) // max(per, 1)))
    if N >= 2:
        b = min(b, (N + 1) // 2)         # keep at least 2 grid steps
    while N % b:
        b -= 1
    return b


@functools.partial(jax.jit,
                   static_argnames=("temporal_window_size", "stride", "residual"))
def temporal_basic_block(x, params, res_module, *, temporal_window_size,
                         stride=1, residual=False, eps=1e-5):
    """Pallas forward of TemporalBasicBlock.

    x:          [N, C, T, V]   (torch layout: channels, frames, joints)
    res_module: [N, C, T_out, V]
    returns     [N, C, T_out, V]
    """
    N, C, T, V = x.shape
    K = temporal_window_size
    pad = (K - 1) // 2
    T_out = (T + 2 * pad - K) // stride + 1

    if not residual:
        res_mode = "none"
    elif stride == 1:
        res_mode = "identity"
        if T_out != T:
            raise ValueError("identity residual requires odd temporal_window_size")
    else:
        res_mode = "downsample"

    # Fold conv bias + inference BN into the conv weights (scale) and one bias.
    scale = params["bn_gamma"] / jnp.sqrt(params["bn_var"] + eps)               # [C_out]
    bias = (params["bn_beta"] - params["bn_mean"] * scale
            + params["conv_b"] * scale).reshape(1, C).astype(jnp.float32)
    # Conv weight [C_out, C_in, K, 1] -> per-tap mixing matrices [K, C_in, C_out]
    # with BN scale folded into the output-channel axis; bf16 MXU operands.
    w = jnp.transpose(params["conv_w"][:, :, :, 0], (2, 1, 0))
    w = (w * scale[None, None, :]).astype(jnp.bfloat16)

    # Channels-last activations: lanes = C (MXU contraction dim), sublanes = V.
    x_cl = jnp.transpose(x, (0, 2, 3, 1)).astype(jnp.bfloat16)                  # [N,T,V,C]
    rm_cl = jnp.transpose(res_module, (0, 2, 3, 1)).astype(jnp.bfloat16)        # [N,T_out,V,C]

    Bn = _pick_block_n(N, T, T_out, V, C)

    args = [x_cl, w, bias]
    in_specs = [pl.BlockSpec((Bn, T, V, C), lambda n: (n, 0, 0, 0)),
                pl.BlockSpec((K, C, C), lambda n: (0, 0, 0)),
                pl.BlockSpec((1, C), lambda n: (0, 0))]
    if res_mode == "downsample":
        r_scale = params["res_bn_gamma"] / jnp.sqrt(params["res_bn_var"] + eps)
        br = (params["res_bn_beta"] - params["res_bn_mean"] * r_scale
              + params["res_conv_b"] * r_scale).reshape(1, C).astype(jnp.float32)
        wr = (params["res_conv_w"][:, :, 0, 0].T
              * r_scale[None, :]).astype(jnp.bfloat16)                          # [C_in,C_out]
        args += [wr, br]
        in_specs += [pl.BlockSpec((C, C), lambda n: (0, 0)),
                     pl.BlockSpec((1, C), lambda n: (0, 0))]
    args.append(rm_cl)
    in_specs.append(pl.BlockSpec((Bn, T_out, V, C), lambda n: (n, 0, 0, 0)))

    kernel = functools.partial(_tbb_kernel, K=K, stride=stride, pad=pad,
                               res_mode=res_mode)
    out_cl = pl.pallas_call(
        kernel,
        out_shape=jax.ShapeDtypeStruct((N, T_out, V, C), x.dtype),
        grid_spec=pltpu.PrefetchScalarGridSpec(
            num_scalar_prefetch=0,
            grid=(N // Bn,),
            in_specs=in_specs,
            out_specs=pl.BlockSpec((Bn, T_out, V, C), lambda n: (n, 0, 0, 0)),
            scratch_shapes=[pltpu.VMEM((Bn, T_out, V, C), jnp.float32)]),
        compiler_params=pltpu.CompilerParams(
            dimension_semantics=("parallel",),           # megacore split over batch blocks
            vmem_limit_bytes=32 * 1024 * 1024),           # explicit budget (fits v7x)
    )(*args)
    return jnp.transpose(out_cl, (0, 3, 1, 2))                                  # [N,C,T_out,V]


# ---------------------------- pure-JAX reference -----------------------------

def _bn_nchw(y, gamma, beta, mean, var, eps):
    s = gamma / jnp.sqrt(var + eps)
    return y * s[None, :, None, None] + (beta - mean * s)[None, :, None, None]


def temporal_basic_block_reference(x, params, res_module, *, temporal_window_size,
                                   stride=1, residual=False, eps=1e-5):
    K = temporal_window_size
    p = (K - 1) // 2
    y = jax.lax.conv_general_dilated(
        x, params["conv_w"], window_strides=(stride, 1),
        padding=((p, p), (0, 0)), dimension_numbers=("NCHW", "OIHW", "NCHW"))
    y = y + params["conv_b"][None, :, None, None]
    y = _bn_nchw(y, params["bn_gamma"], params["bn_beta"],
                 params["bn_mean"], params["bn_var"], eps)
    if not residual:
        res = 0.0
    elif stride == 1:
        res = x
    else:
        r = jax.lax.conv_general_dilated(
            x, params["res_conv_w"], window_strides=(stride, 1),
            padding=((0, 0), (0, 0)), dimension_numbers=("NCHW", "OIHW", "NCHW"))
        r = r + params["res_conv_b"][None, :, None, None]
        res = _bn_nchw(r, params["res_bn_gamma"], params["res_bn_beta"],
                       params["res_bn_mean"], params["res_bn_var"], eps)
    return jax.nn.relu(y + res + res_module)


if __name__ == "__main__":
    key = jax.random.PRNGKey(0)
    N, C, T, V, K = 2, 128, 16, 8, 3    # small, lane-dense (C = 128 lanes, V = 8 sublanes)
    ks = jax.random.split(key, 14)

    x = jax.random.normal(ks[0], (N, C, T, V), dtype=jnp.float32)
    params = {
        "conv_w": jax.random.normal(ks[1], (C, C, K, 1), jnp.float32) / np.sqrt(C * K),
        "conv_b": 0.1 * jax.random.normal(ks[2], (C,), jnp.float32),
        "bn_gamma": 1.0 + 0.1 * jax.random.normal(ks[3], (C,), jnp.float32),
        "bn_beta": 0.1 * jax.random.normal(ks[4], (C,), jnp.float32),
        "bn_mean": 0.1 * jax.random.normal(ks[5], (C,), jnp.float32),
        "bn_var": jax.random.uniform(ks[6], (C,), jnp.float32, 0.5, 1.5),
        "res_conv_w": jax.random.normal(ks[7], (C, C, 1, 1), jnp.float32) / np.sqrt(C),
        "res_conv_b": 0.1 * jax.random.normal(ks[8], (C,), jnp.float32),
        "res_bn_gamma": 1.0 + 0.1 * jax.random.normal(ks[9], (C,), jnp.float32),
        "res_bn_beta": 0.1 * jax.random.normal(ks[10], (C,), jnp.float32),
        "res_bn_mean": 0.1 * jax.random.normal(ks[11], (C,), jnp.float32),
        "res_bn_var": jax.random.uniform(ks[12], (C,), jnp.float32, 0.5, 1.5),
    }

    configs = [
        dict(stride=1, residual=True),    # identity residual
        dict(stride=1, residual=False),   # no residual
        dict(stride=2, residual=True),    # 1x1-conv(stride)+BN downsample residual
    ]
    for cfg in configs:
        T_out = (T + 2 * ((K - 1) // 2) - K) // cfg["stride"] + 1
        rm = 0.5 * jax.random.normal(ks[13], (N, C, T_out, V), jnp.float32)

        out = temporal_basic_block(x, params, rm, temporal_window_size=K, **cfg)
        out = jax.block_until_ready(out)
        ref = temporal_basic_block_reference(x, params, rm,
                                             temporal_window_size=K, **cfg)
        assert out.shape == (N, C, T_out, V)
        # Tolerance covers bf16 activation/weight operands with f32 accumulation.
        np.testing.assert_allclose(np.asarray(out), np.asarray(ref),
                                   rtol=2e-2, atol=5e-2)

    print("KERNEL_OK")
</pallas_src>

<mosaic_0001>
module attributes {stable_mosaic.version = 11 : i64} {
  func.func @_tbb_kernel(%arg0: i32, %arg1: memref<1x16x8x128xbf16, #tpu.memory_space<vmem>>, %arg2: memref<3x128x128xbf16, #tpu.memory_space<vmem>>, %arg3: memref<1x128xf32, #tpu.memory_space<vmem>>, %arg4: memref<1x16x8x128xbf16, #tpu.memory_space<vmem>>, %arg5: memref<1x16x8x128xf32, #tpu.memory_space<vmem>>, %arg6: memref<1x16x8x128xf32, #tpu.memory_space<vmem>>) attributes {dimension_semantics = [#tpu.dimension_semantics<parallel>], iteration_bounds = array<i64: 2>, scalar_prefetch = 0 : i64, scratch_operands = 1 : i64, tpu.core_type = #tpu.core_type<tc>, window_params = [{transform_indices = @transform_0, window_bounds = array<i64: 1, 16, 8, 128>}, {pipeline_mode = #tpu.pipeline_mode<synchronous>, transform_indices = @transform_1, window_bounds = array<i64: 3, 128, 128>}, {pipeline_mode = #tpu.pipeline_mode<synchronous>, transform_indices = @transform_2, window_bounds = array<i64: 1, 128>}, {transform_indices = @transform_3, window_bounds = array<i64: 1, 16, 8, 128>}, {transform_indices = @transform_4, window_bounds = array<i64: 1, 16, 8, 128>}]} {
    %c0 = arith.constant 0 : index
    %c0_0 = arith.constant 0 : index
    %c0_1 = arith.constant 0 : index
    %c0_2 = arith.constant 0 : index
    %0 = vector.load %arg1[%c0, %c0_0, %c0_1, %c0_2] : memref<1x16x8x128xbf16, #tpu.memory_space<vmem>>, vector<1x16x8x128xbf16>
    %1 = vector.shape_cast %0 : vector<1x16x8x128xbf16> to vector<128x128xbf16>
    %c1 = arith.constant 1 : index
    %c0_3 = arith.constant 0 : index
    %c0_4 = arith.constant 0 : index
    %2 = vector.load %arg2[%c1, %c0_3, %c0_4] : memref<3x128x128xbf16, #tpu.memory_space<vmem>>, vector<1x128x128xbf16>
    %3 = vector.shape_cast %2 : vector<1x128x128xbf16> to vector<128x128xbf16>
    %cst = arith.constant dense<0.000000e+00> : vector<128x128xf32>
    %4 = tpu.matmul %1, %3, %cst {dimension_numbers = #tpu.dot_dimension_numbers<[1], [0], [0], [1], [0, 0, 1, 1], [], []>} : vector<128x128xbf16>, vector<128x128xbf16>, vector<128x128xf32> -> vector<128x128xf32>
    %5 = vector.shape_cast %4 : vector<128x128xf32> to vector<1x16x8x128xf32>
    %c0_5 = arith.constant 0 : index
    %c0_6 = arith.constant 0 : index
    %c0_7 = arith.constant 0 : index
    %c0_8 = arith.constant 0 : index
    %6 = vector.load %arg6[%c0_5, %c0_6, %c0_7, %c0_8] : memref<1x16x8x128xf32, #tpu.memory_space<vmem>>, vector<1x16x8x128xf32>
    tpu.vector_store %arg6[%c0_5, %c0_6, %c0_7, %c0_8], %5 {strides = array<i32>} : memref<1x16x8x128xf32, #tpu.memory_space<vmem>>, vector<1x16x8x128xf32>,
    %c0_9 = arith.constant 0 : index
    %c0_10 = arith.constant 0 : index
    %c0_11 = arith.constant 0 : index
    %c0_12 = arith.constant 0 : index
    %7 = vector.load %arg1[%c0_9, %c0_10, %c0_11, %c0_12] : memref<1x16x8x128xbf16, #tpu.memory_space<vmem>>, vector<1x15x8x128xbf16>
    %8 = vector.shape_cast %7 : vector<1x15x8x128xbf16> to vector<120x128xbf16>
    %c0_13 = arith.constant 0 : index
    %c0_14 = arith.constant 0 : index
    %c0_15 = arith.constant 0 : index
    %9 = vector.load %arg2[%c0_13, %c0_14, %c0_15] : memref<3x128x128xbf16, #tpu.memory_space<vmem>>, vector<1x128x128xbf16>
    %10 = vector.shape_cast %9 : vector<1x128x128xbf16> to vector<128x128xbf16>
    %cst_16 = arith.constant dense<0.000000e+00> : vector<120x128xf32>
    %11 = tpu.matmul %8, %10, %cst_16 {dimension_numbers = #tpu.dot_dimension_numbers<[1], [0], [0], [1], [0, 0, 1, 1], [], []>} : vector<120x128xbf16>, vector<128x128xbf16>, vector<120x128xf32> -> vector<120x128xf32>
    %12 = vector.shape_cast %11 : vector<120x128xf32> to vector<1x15x8x128xf32>
    %c0_17 = arith.constant 0 : index
    %c1_18 = arith.constant 1 : index
    %c0_19 = arith.constant 0 : index
    %c0_20 = arith.constant 0 : index
    %13 = vector.load %arg6[%c0_17, %c1_18, %c0_19, %c0_20] : memref<1x16x8x128xf32, #tpu.memory_space<vmem>>, vector<1x15x8x128xf32>
    %14 = arith.addf %13, %12 : vector<1x15x8x128xf32>
    %c0_21 = arith.constant 0 : index
    %c1_22 = arith.constant 1 : index
    %c0_23 = arith.constant 0 : index
    %c0_24 = arith.constant 0 : index
    %15 = vector.load %arg6[%c0_21, %c1_22, %c0_23, %c0_24] : memref<1x16x8x128xf32, #tpu.memory_space<vmem>>, vector<1x15x8x128xf32>
    tpu.vector_store %arg6[%c0_21, %c1_22, %c0_23, %c0_24], %14 {strides = array<i32>} : memref<1x16x8x128xf32, #tpu.memory_space<vmem>>, vector<1x15x8x128xf32>,
    %c0_25 = arith.constant 0 : index
    %c1_26 = arith.constant 1 : index
    %c0_27 = arith.constant 0 : index
    %c0_28 = arith.constant 0 : index
    %16 = vector.load %arg1[%c0_25, %c1_26, %c0_27, %c0_28] : memref<1x16x8x128xbf16, #tpu.memory_space<vmem>>, vector<1x15x8x128xbf16>
    %17 = vector.shape_cast %16 : vector<1x15x8x128xbf16> to vector<120x128xbf16>
    %c2 = arith.constant 2 : index
    %c0_29 = arith.constant 0 : index
    %c0_30 = arith.constant 0 : index
    %18 = vector.load %arg2[%c2, %c0_29, %c0_30] : memref<3x128x128xbf16, #tpu.memory_space<vmem>>, vector<1x128x128xbf16>
    %19 = vector.shape_cast %18 : vector<1x128x128xbf16> to vector<128x128xbf16>
    %cst_31 = arith.constant dense<0.000000e+00> : vector<120x128xf32>
    %20 = tpu.matmul %17, %19, %cst_31 {dimension_numbers = #tpu.dot_dimension_numbers<[1], [0], [0], [1], [0, 0, 1, 1], [], []>} : vector<120x128xbf16>, vector<128x128xbf16>, vector<120x128xf32> -> vector<120x128xf32>
    %21 = vector.shape_cast %20 : vector<120x128xf32> to vector<1x15x8x128xf32>
    %c0_32 = arith.constant 0 : index
    %c0_33 = arith.constant 0 : index
    %c0_34 = arith.constant 0 : index
    %c0_35 = arith.constant 0 : index
    %22 = vector.load %arg6[%c0_32, %c0_33, %c0_34, %c0_35] : memref<1x16x8x128xf32, #tpu.memory_space<vmem>>, vector<1x15x8x128xf32>
    %23 = arith.addf %22, %21 : vector<1x15x8x128xf32>
    %c0_36 = arith.constant 0 : index
    %c0_37 = arith.constant 0 : index
    %c0_38 = arith.constant 0 : index
    %c0_39 = arith.constant 0 : index
    %24 = vector.load %arg6[%c0_36, %c0_37, %c0_38, %c0_39] : memref<1x16x8x128xf32, #tpu.memory_space<vmem>>, vector<1x15x8x128xf32>
    tpu.vector_store %arg6[%c0_36, %c0_37, %c0_38, %c0_39], %23 {strides = array<i32>} : memref<1x16x8x128xf32, #tpu.memory_space<vmem>>, vector<1x15x8x128xf32>,
    %c0_40 = arith.constant 0 : index
    %c0_41 = arith.constant 0 : index
    %c0_42 = arith.constant 0 : index
    %c0_43 = arith.constant 0 : index
    %25 = vector.load %arg6[%c0_40, %c0_41, %c0_42, %c0_43] : memref<1x16x8x128xf32, #tpu.memory_space<vmem>>, vector<1x16x8x128xf32>
    %c0_44 = arith.constant 0 : index
    %c0_45 = arith.constant 0 : index
    %26 = vector.load %arg3[%c0_44, %c0_45] : memref<1x128xf32, #tpu.memory_space<vmem>>, vector<1x128xf32>
    %27 = vector.shape_cast %26 : vector<1x128xf32> to vector<1x1x1x128xf32>
    %28 = vector.broadcast %27 : vector<1x1x1x128xf32> to vector<1x16x8x128xf32>
    %29 = arith.addf %25, %28 : vector<1x16x8x128xf32>
    %c0_46 = arith.constant 0 : index
    %c0_47 = arith.constant 0 : index
    %c0_48 = arith.constant 0 : index
    %c0_49 = arith.constant 0 : index
    %30 = vector.load %arg4[%c0_46, %c0_47, %c0_48, %c0_49] : memref<1x16x8x128xbf16, #tpu.memory_space<vmem>>, vector<1x16x8x128xbf16>
    %31 = arith.extf %30 : vector<1x16x8x128xbf16> to vector<1x16x8x128xf32>
    %32 = arith.addf %29, %31 : vector<1x16x8x128xf32>
    %c0_50 = arith.constant 0 : index
    %c0_51 = arith.constant 0 : index
    %c0_52 = arith.constant 0 : index
    %c0_53 = arith.constant 0 : index
    %33 = vector.load %arg1[%c0_50, %c0_51, %c0_52, %c0_53] : memref<1x16x8x128xbf16, #tpu.memory_space<vmem>>, vector<1x16x8x128xbf16>
    %34 = arith.extf %33 : vector<1x16x8x128xbf16> to vector<1x16x8x128xf32>
    %35 = arith.addf %32, %34 : vector<1x16x8x128xf32>
    %cst_54 = arith.constant 0.000000e+00 : f32
    %36 = vector.broadcast %cst_54 : f32 to vector<1x16x8x128xf32>
    %37 = arith.maximumf %35, %36 : vector<1x16x8x128xf32>
    %c0_55 = arith.constant 0 : index
    %c0_56 = arith.constant 0 : index
    %c0_57 = arith.constant 0 : index
    %c0_58 = arith.constant 0 : index
    %38 = vector.load %arg5[%c0_55, %c0_56, %c0_57, %c0_58] : memref<1x16x8x128xf32, #tpu.memory_space<vmem>>, vector<1x16x8x128xf32>
    tpu.vector_store %arg5[%c0_55, %c0_56, %c0_57, %c0_58], %37 {strides = array<i32>} : memref<1x16x8x128xf32, #tpu.memory_space<vmem>>, vector<1x16x8x128xf32>,
    return
  }
  func.func @transform_0(%arg0: i32) -> (i32, i32, i32, i32) {
    %c0_i32 = arith.constant 0 : i32
    %c0_i32_0 = arith.constant 0 : i32
    %c0_i32_1 = arith.constant 0 : i32
    %c0_i32_2 = arith.constant 0 : i32
    return %arg0, %c0_i32, %c0_i32_0, %c0_i32_1 : i32, i32, i32, i32
  }
  func.func @transform_1(%arg0: i32) -> (i32, i32, i32) {
    %c0_i32 = arith.constant 0 : i32
    %c0_i32_0 = arith.constant 0 : i32
    %c0_i32_1 = arith.constant 0 : i32
    %c0_i32_2 = arith.constant 0 : i32
    return %c0_i32, %c0_i32_0, %c0_i32_1 : i32, i32, i32
  }
  func.func @transform_2(%arg0: i32) -> (i32, i32) {
    %c0_i32 = arith.constant 0 : i32
    %c0_i32_0 = arith.constant 0 : i32
    %c0_i32_1 = arith.constant 0 : i32
    return %c0_i32, %c0_i32_0 : i32, i32
  }
  func.func @transform_3(%arg0: i32) -> (i32, i32, i32, i32) {
    %c0_i32 = arith.constant 0 : i32
    %c0_i32_0 = arith.constant 0 : i32
    %c0_i32_1 = arith.constant 0 : i32
    %c0_i32_2 = arith.constant 0 : i32
    return %arg0, %c0_i32, %c0_i32_0, %c0_i32_1 : i32, i32, i32, i32
  }
  func.func @transform_4(%arg0: i32) -> (i32, i32, i32, i32) {
    %c0_i32 = arith.constant 0 : i32
    %c0_i32_0 = arith.constant 0 : i32
    %c0_i32_1 = arith.constant 0 : i32
    %c0_i32_2 = arith.constant 0 : i32
    return %arg0, %c0_i32, %c0_i32_0, %c0_i32_1 : i32, i32, i32, i32
  }
}

</mosaic_0001>

<llo_original>
// kernel: temporal_basic_block.1
$region0: #{temporal_basic_block.1}
  #allocation0 [shape = 'u32[]', space=smem, size = 0x4, offset = 0x4, fixed_abs, tag = 'smem constant byte address 0x4 - core index']
  #allocation1 [shape = 'u32[144,128]{1,0:T(1,128)}', space=vmem, size = 0x12000, scoped, tag = 'internal scratch']
  #allocation2 [shape = 'f32[1,16,8,128]{3,2,1,0:T(8,128)}', space=vmem, size = 0x10000, scoped, tag = 'scratch operand']
  %s0 = inlined_call_operand.vmem [shape: bf16[2,16,8,128], index: 0, kind: input, shape index: {}]
  %s1 = inlined_call_operand.vmem [shape: bf16[3,128,128], index: 1, kind: input, shape index: {}]
  %s2 = inlined_call_operand.vmem [shape: f32[1,128], index: 2, kind: input, shape index: {}]
  %s3 = inlined_call_operand.vmem [shape: bf16[2,16,8,128], index: 3, kind: input, shape index: {}]
  %s4 = inlined_call_operand.hbm [shape: f32[2,16,8,128], index: 4, kind: output, shape index: {}]
  %s5 = sld [smem:[#allocation0]]
  $region49: #{temporal_basic_block.1} parent=0
    _
  %s7 = ssub.s32 1, %s5
  %s8 = scalar_select 0, %s7, %s5
  $region1: #{temporal_basic_block.1} parent=0
    #allocation3 [shape = 'u8[131072]{0}', space=vmem, size = 0x20000, scoped, tag = 'output window, operand 0']
    #allocation4 [shape = 's32[2]{0}', space=sflag, size = 0x8, scoped, tag = 'scoped memory for temporal_basic_block.1']
    %9 = vsyncpa [#allocation4], 0
    %s10 = scalar_lea.sflag [#allocation4], 1
    %11 = vsyncpa %s10, 0
    loop: start=0, step=1, limit=4
    $region2: #{temporal_basic_block.1} parent=1 // loop_pre_header
      _
    $region3: #{temporal_basic_block.1} parent=1 // loop_header
      %s13 = sphi 0, %s17
      %p14 = scmp.ge.s32.totalorder %s13, 4
      %s23 = sphi 0, %s25
      %s26 = sphi 0, %s23
      %s27 = sphi 0, %s26
      %s43 = sphi 0, %s27
      %s47 = sphi 0, %s47
      %s49 = sphi 0, %s47
      %s50 = sphi 0, %s49
      %s64 = sphi 0, %s50
      %s68 = sphi 0, %s68
      %s70 = sphi 0, %s68
      %s71 = sphi 0, %s70
      %s85 = sphi 0, %s71
      %s91 = sphi 0, %s93
      %s94 = sphi 0, %s91
      %s95 = sphi 0, %s94
      %s111 = sphi 0, %s95
      %s117 = sphi 0, %s119
      %s120 = sphi 0, %s117
      %s121 = sphi 0, %s120
      %s137 = sphi 0, %s121
    $region4: #{temporal_basic_block.1} parent=1 // loop_header_branch
      %16 = sbr.rel (%p14) target = $region8
    $region5: #{temporal_basic_block.1} parent=1 // loop_body
      %s18 = ssub.s32 %s13, 1
      %s19 = ssub.s32 %s13, 2
      %s20 = sadd.s32 %s13, 1
      %s21 = ssub.s32 %s13, %s20
      %p22 = scmp.eq.s32.totalorder %s21, 0
      %s24 = sadd.s32 %s23, 1
      %s25 = scalar_select %p22, %s23, %s24
      %p28 = pneg %p22
      %p29 = scmp.eq.s32.totalorder %s13, 1
      %p30 = por %p28, %p29
      %p31 = scmp.ne.s32.totalorder %s23, %s26
      %p32 = scmp.eq.s32.totalorder %s13, 0
      %p33 = por %p31, %p32
      %p34 = scmp.ne.s32.totalorder %s23, %s26
      %p35 = scmp.eq.s32.totalorder %s18, 1
      %p36 = por %p34, %p35
      %p37 = scmp.ne.s32.totalorder %s26, %s27
      %p38 = scmp.eq.s32.totalorder %s18, 0
      %p39 = por %p37, %p38
      %p40 = scmp.ne.s32.totalorder %s26, %s27
      %p41 = scmp.eq.s32.totalorder %s19, 1
      %p42 = por %p40, %p41
      %p44 = scmp.ne.s32.totalorder %s27, %s43
      %p45 = scmp.eq.s32.totalorder %s19, 0
      %p46 = por %p44, %p45
      %s48 = sadd.s32 %s47, 1
      %p51 = scmp.eq.s32.totalorder %s13, 1
      %p52 = scmp.ne.s32.totalorder %s47, %s49
      %p53 = scmp.eq.s32.totalorder %s13, 0
      %p54 = por %p52, %p53
      %p55 = scmp.ne.s32.totalorder %s47, %s49
      %p56 = scmp.eq.s32.totalorder %s18, 1
      %p57 = por %p55, %p56
      %p58 = scmp.ne.s32.totalorder %s49, %s50
      %p59 = scmp.eq.s32.totalorder %s18, 0
      %p60 = por %p58, %p59
      %p61 = scmp.ne.s32.totalorder %s49, %s50
      %p62 = scmp.eq.s32.totalorder %s19, 1
      %p63 = por %p61, %p62
      %p65 = scmp.ne.s32.totalorder %s50, %s64
      %p66 = scmp.eq.s32.totalorder %s19, 0
      %p67 = por %p65, %p66
      %s69 = sadd.s32 %s68, 1
      %p72 = scmp.eq.s32.totalorder %s13, 1
      %p73 = scmp.ne.s32.totalorder %s68, %s70
      %p74 = scmp.eq.s32.totalorder %s13, 0
      %p75 = por %p73, %p74
      %p76 = scmp.ne.s32.totalorder %s68, %s70
      %p77 = scmp.eq.s32.totalorder %s18, 1
      %p78 = por %p76, %p77
      %p79 = scmp.ne.s32.totalorder %s70, %s71
      %p80 = scmp.eq.s32.totalorder %s18, 0
      %p81 = por %p79, %p80
      %p82 = scmp.ne.s32.totalorder %s70, %s71
      %p83 = scmp.eq.s32.totalorder %s19, 1
      %p84 = por %p82, %p83
      %p86 = scmp.ne.s32.totalorder %s71, %s85
      %p87 = scmp.eq.s32.totalorder %s19, 0
      %p88 = por %p86, %p87
      %s89 = ssub.s32 %s13, %s20
      %p90 = scmp.eq.s32.totalorder %s89, 0
      %s92 = sadd.s32 %s91, 1
      %s93 = scalar_select %p90, %s91, %s92
      %p96 = pneg %p90
      %p97 = scmp.eq.s32.totalorder %s13, 1
      %p98 = por %p96, %p97
      %p99 = scmp.ne.s32.totalorder %s91, %s94
      %p100 = scmp.eq.s32.totalorder %s13, 0
      %p101 = por %p99, %p100
      %p102 = scmp.ne.s32.totalorder %s91, %s94
      %p103 = scmp.eq.s32.totalorder %s18, 1
      %p104 = por %p102, %p103
      %p105 = scmp.ne.s32.totalorder %s94, %s95
      %p106 = scmp.eq.s32.totalorder %s18, 0
      %p107 = por %p105, %p106
      %p108 = scmp.ne.s32.totalorder %s94, %s95
      %p109 = scmp.eq.s32.totalorder %s19, 1
      %p110 = por %p108, %p109
      %p112 = scmp.ne.s32.totalorder %s95, %s111
      %p113 = scmp.eq.s32.totalorder %s19, 0
      %p114 = por %p112, %p113
      %s115 = ssub.s32 %s13, %s20
      %p116 = scmp.eq.s32.totalorder %s115, 0
      %s118 = sadd.s32 %s117, 1
      %s119 = scalar_select %p116, %s117, %s118
      %p122 = pneg %p116
      %p123 = scmp.eq.s32.totalorder %s13, 1
      %p124 = por %p122, %p123
      %p125 = scmp.ne.s32.totalorder %s117, %s120
      %p126 = scmp.eq.s32.totalorder %s13, 0
      %p127 = por %p125, %p126
      %p128 = scmp.ne.s32.totalorder %s117, %s120
      %p129 = scmp.eq.s32.totalorder %s18, 1
      %p130 = por %p128, %p129
      %p131 = scmp.ne.s32.totalorder %s120, %s121
      %p132 = scmp.eq.s32.totalorder %s18, 0
      %p133 = por %p131, %p132
      %p134 = scmp.ne.s32.totalorder %s120, %s121
      %p135 = scmp.eq.s32.totalorder %s19, 1
      %p136 = por %p134, %p135
      %p138 = scmp.ne.s32.totalorder %s121, %s137
      %p139 = scmp.eq.s32.totalorder %s19, 0
      %p140 = por %p138, %p139
      %p141 = scmp.le.s32.totalorder 1, %s13
      %p142 = scmp.lt.s32.totalorder %s13, 3
      %p143 = pnand %p141, %p142
      %p144 = pneg %p143
      // Predicated region
      $region9: #{temporal_basic_block.1} parent=5 // pred_check
        _
      $region10: #{temporal_basic_block.1} parent=5 // pred_check_branch
        %146 = sbr.rel (%p143) target = $region12
      $region11: #{temporal_basic_block.1} parent=5 // pred_region
        %s147 = ssub.s32 %s13, 1
        // Predicated region
        $region13: #{temporal_basic_block.1} parent=11 // pred_check
          %p148 = pneg %p60
        $region14: #{temporal_basic_block.1} parent=11 // pred_check_branch
          %150 = sbr.rel (%p148) target = $region16
        $region15: #{temporal_basic_block.1} parent=11 // pred_region
          _
        $region16: #{temporal_basic_block.1} parent=11 // pred_fallthru
          _
        // Predicated region
        $region17: #{temporal_basic_block.1} parent=11 // pred_check
          %p151 = pneg %p81
        $region18: #{temporal_basic_block.1} parent=11 // pred_check_branch
          %153 = sbr.rel (%p151) target = $region20
        $region19: #{temporal_basic_block.1} parent=11 // pred_region
          _
        $region20: #{temporal_basic_block.1} parent=11 // pred_fallthru
          _
      $region12: #{temporal_basic_block.1} parent=5 // pred_fallthru
        _
      %p154 = scmp.lt.s32.totalorder %s13, 2
      // Predicated region
      $region21: #{temporal_basic_block.1} parent=5 // pred_check
        %p155 = pneg %p154
      $region22: #{temporal_basic_block.1} parent=5 // pred_check_branch
        %157 = sbr.rel (%p155) target = $region24
      $region23: #{temporal_basic_block.1} parent=5 // pred_region
        // Predicated region
        $region25: #{temporal_basic_block.1} parent=23 // pred_check
          %p158 = pneg %p33
        $region26: #{temporal_basic_block.1} parent=23 // pred_check_branch
          %160 = sbr.rel (%p158) target = $region28
        $region27: #{temporal_basic_block.1} parent=23 // pred_region
          %p161 = scmp.lt.s32.totalorder %s13, 1
          %s162 = scalar_select %p161, %s13, 1
          %s163 = smul.addr %s162, 16
          %s164 = smul.addr %s163, 4
          %s165 = scalar_lea.vmem %s0, %s164
        $region28: #{temporal_basic_block.1} parent=23 // pred_fallthru
          _
        // Predicated region
        $region29: #{temporal_basic_block.1} parent=23 // pred_check
          %p166 = pneg %p101
        $region30: #{temporal_basic_block.1} parent=23 // pred_check_branch
          %168 = sbr.rel (%p166) target = $region32
        $region31: #{temporal_basic_block.1} parent=23 // pred_region
          %p169 = scmp.lt.s32.totalorder %s13, 1
          %s170 = scalar_select %p169, %s13, 1
          %s171 = smul.addr %s170, 16
          %s172 = smul.addr %s171, 4
          %s173 = scalar_lea.vmem %s3, %s172
        $region32: #{temporal_basic_block.1} parent=23 // pred_fallthru
          _
      $region24: #{temporal_basic_block.1} parent=5 // pred_fallthru
        _
      %p174 = scmp.le.s32.totalorder 1, %s13
      %p175 = scmp.lt.s32.totalorder %s13, 3
      %p176 = pnand %p174, %p175
      %p177 = pneg %p176
      // Predicated region
      $region33: #{temporal_basic_block.1} parent=5 // pred_check
        _
      $region34: #{temporal_basic_block.1} parent=5 // pred_check_branch
        %179 = sbr.rel (%p176) target = $region36
      $region35: #{temporal_basic_block.1} parent=5 // pred_region
        %s180 = ssub.s32 %s13, 1
        %p181 = scmp.lt.s32.totalorder %s18, 1
        %s182 = scalar_select %p181, %s18, 1
        %s183 = smul.addr %s182, 16
        %s184 = smul.addr %s183, 4
        %s185 = scalar_lea.vmem %s0, %s184
        %p186 = pneg %p39
        %p187 = pneg %p36
        %p188 = pneg %p60
        %p189 = pneg %p57
        %p190 = pneg %p81
        %p191 = pneg %p78
        %p192 = scmp.lt.s32.totalorder %s18, 1
        %s193 = scalar_select %p192, %s18, 1
        %s194 = smul.addr %s193, 16
        %s195 = smul.addr %s194, 4
        %s196 = scalar_lea.vmem %s3, %s195
        %p197 = pneg %p107
        %p198 = pneg %p104
        %p199 = pneg %p133
        %p200 = pneg %p130
        %s201 = sand.u32 %s120, 1
        %s202 = scalar_lea.sflag [#allocation4], %s201
        %s203 = sand.u32 %s120, 1
        %s204 = smul.addr %s203, 128
        %s205 = scalar_lea.vmem [#allocation3], %s204
        %p206 = scmp.lt.s32.totalorder %s18, 1
        %s207 = scalar_select %p206, %s18, 1
        %s208 = smul.addr %s207, 16
        %s209 = smul.addr %s208, 4
        %s210 = scalar_lea.vmem %s0, %s209
        %p211 = scmp.lt.s32.totalorder %s18, 1
        %s212 = scalar_select %p211, %s18, 1
        %s213 = smul.addr %s212, 16
        %s214 = smul.addr %s213, 4
        %s215 = scalar_lea.vmem %s3, %s214
        %v217 = vld [vmem:[%s210] sm:$0xf]
        %v218 = vld [vmem:[%s210 + $0x4] sm:$0xf]
        %v219 = vld [vmem:[%s210 + $0x8] sm:$0xf]
        %v220 = vld [vmem:[%s210 + $0xc] sm:$0xf]
        %v221 = vld [vmem:[%s210 + $0x10] sm:$0xf]
        %v222 = vld [vmem:[%s210 + $0x14] sm:$0xf]
        %v223 = vld [vmem:[%s210 + $0x18] sm:$0xf]
        %v224 = vld [vmem:[%s210 + $0x1c] sm:$0xf]
        %v225 = vld [vmem:[%s210 + $0x20] sm:$0xf]
        %v226 = vld [vmem:[%s210 + $0x24] sm:$0xf]
        %v227 = vld [vmem:[%s210 + $0x28] sm:$0xf]
        %v228 = vld [vmem:[%s210 + $0x2c] sm:$0xf]
        %v229 = vld [vmem:[%s210 + $0x30] sm:$0xf]
        %v230 = vld [vmem:[%s210 + $0x34] sm:$0xf]
        %v231 = vld [vmem:[%s210 + $0x38] sm:$0xf]
        %v232 = vld [vmem:[%s210 + $0x3c] sm:$0xf]
        %s233 = scalar_lea.vmem %s1, 64
        %v234 = vld [vmem:[%s233] sm:$0xf]
        %v235 = vld [vmem:[%s233 + $0x4] sm:$0xf]
        %v236 = vld [vmem:[%s233 + $0x8] sm:$0xf]
        %v237 = vld [vmem:[%s233 + $0xc] sm:$0xf]
        %v238 = vld [vmem:[%s233 + $0x10] sm:$0xf]
        %v239 = vld [vmem:[%s233 + $0x14] sm:$0xf]
        %v240 = vld [vmem:[%s233 + $0x18] sm:$0xf]
        %v241 = vld [vmem:[%s233 + $0x1c] sm:$0xf]
        %v242 = vld [vmem:[%s233 + $0x20] sm:$0xf]
        %v243 = vld [vmem:[%s233 + $0x24] sm:$0xf]
        %v244 = vld [vmem:[%s233 + $0x28] sm:$0xf]
        %v245 = vld [vmem:[%s233 + $0x2c] sm:$0xf]
        %v246 = vld [vmem:[%s233 + $0x30] sm:$0xf]
        %v247 = vld [vmem:[%s233 + $0x34] sm:$0xf]
        %v248 = vld [vmem:[%s233 + $0x38] sm:$0xf]
        %v249 = vld [vmem:[%s233 + $0x3c] sm:$0xf]
        %v266 = vunpack.c.l.b16 %v217
        %v267 = vunpack.c.l.b16 %v218
        %v268 = vunpack.c.l.b16 %v219
        %v269 = vunpack.c.l.b16 %v220
        %v270 = vunpack.c.l.b16 %v221
        %v271 = vunpack.c.l.b16 %v222
        %v272 = vunpack.c.l.b16 %v223
        %v273 = vunpack.c.l.b16 %v224
        %v274 = vunpack.c.l.b16 %v225
        %v275 = vunpack.c.l.b16 %v226
        %v276 = vunpack.c.l.b16 %v227
        %v277 = vunpack.c.l.b16 %v228
        %v278 = vunpack.c.l.b16 %v229
        %v279 = vunpack.c.l.b16 %v230
        %v280 = vunpack.c.l.b16 %v231
        %v281 = vunpack.c.l.b16 %v232
        %v282 = vpack.c.b16 %v267, %v266
        %v283 = vpack.c.b16 %v269, %v268
        %v284 = vpack.c.b16 %v271, %v270
        %v285 = vpack.c.b16 %v273, %v272
        %v286 = vpack.c.b16 %v275, %v274
        %v287 = vpack.c.b16 %v277, %v276
        %v288 = vpack.c.b16 %v279, %v278
        %v289 = vpack.c.b16 %v281, %v280
        %v314 = vunpack.c.l.b16 %v234
        %v315 = vunpack.c.l.b16 %v235
        %v316 = vunpack.c.l.b16 %v236
        %v317 = vunpack.c.l.b16 %v237
        %v318 = vunpack.c.l.b16 %v238
        %v319 = vunpack.c.l.b16 %v239
        %v320 = vunpack.c.l.b16 %v240
        %v321 = vunpack.c.l.b16 %v241
        %v322 = vunpack.c.l.b16 %v242
        %v323 = vunpack.c.l.b16 %v243
        %v324 = vunpack.c.l.b16 %v244
        %v325 = vunpack.c.l.b16 %v245
        %v326 = vunpack.c.l.b16 %v246
        %v327 = vunpack.c.l.b16 %v247
        %v328 = vunpack.c.l.b16 %v248
        %v329 = vunpack.c.l.b16 %v249
        %v330 = vpack.c.b16 %v315, %v314
        %v331 = vpack.c.b16 %v317, %v316
        %v332 = vpack.c.b16 %v319, %v318
        %v333 = vpack.c.b16 %v321, %v320
        %v334 = vpack.c.b16 %v323, %v322
        %v335 = vpack.c.b16 %v325, %v324
        %v336 = vpack.c.b16 %v327, %v326
        %v337 = vpack.c.b16 %v329, %v328
        %346 = vmatprep.subr.bf16.mxu0 0
        %347 = vmatpush1.bf16.msra.mxu0 %v330
        %348 = vmatprep.subr.bf16.mxu0 0
        %349 = vmatpush1.bf16.msra.mxu0 %v331
        %350 = vmatprep.subr.bf16.mxu0 0
        %351 = vmatpush1.bf16.msra.mxu0 %v332
        %352 = vmatprep.subr.bf16.mxu0 0
        %353 = vmatpush1.bf16.msra.mxu0 %v333
        %354 = vmatprep.subr.bf16.mxu0 0
        %355 = vmatpush1.bf16.msra.mxu0 %v334
        %356 = vmatprep.subr.bf16.mxu0 0
        %357 = vmatpush1.bf16.msra.mxu0 %v335
        %358 = vmatprep.subr.bf16.mxu0 0
        %359 = vmatpush1.bf16.msra.mxu0 %v336
        %360 = vmatprep.subr.bf16.mxu0 0
        %361 = vmatpush1.bf16.msra.mxu0 %v337
        %362 = vmatprep.subr.bf16.mxu0 0
        %363 = vmatpush1.bf16.msra.mxu0 0
        %364 = vmatprep.subr.bf16.mxu0 0
        %365 = vmatpush1.bf16.msra.mxu0 0
        %366 = vmatprep.subr.bf16.mxu0 0
        %367 = vmatpush1.bf16.msra.mxu0 0
        %368 = vmatprep.subr.bf16.mxu0 0
        %369 = vmatpush1.bf16.msra.mxu0 0
        %370 = vmatprep.subr.bf16.mxu0 0
        %371 = vmatpush1.bf16.msra.mxu0 0
        %372 = vmatprep.subr.bf16.mxu0 0
        %373 = vmatpush1.bf16.msra.mxu0 0
        %374 = vmatprep.subr.bf16.mxu0 0
        %375 = vmatpush1.bf16.msra.mxu0 0
        %376 = vmatprep.subr.bf16.mxu0 0
        %377 = vmatpush1.bf16.msra.mxu0 0
        %378 = vmatprep.mubr.bf16.mxu0 0
        %379 = vmatmul.mubr.bf16.gmra.mrb[0].mxu0 %v282
        %v380 = vpop.f32.mrb[0].mxu0
        %v381 = vadd.f32 0.0, %v380
        %v382 = vpop.f32.mrb[0].mxu0
        %v383 = vpop.f32.mrb[0].mxu0
        %v384 = vadd.f32 0.0, %v383
        %v385 = vpop.f32.mrb[0].mxu0
        %386 = vmatprep.mubr.bf16.mxu0 0
        %387 = vmatmul.mubr.bf16.gmra.mrb[0].mxu0 %v283
        %v388 = vpop.f32.mrb[0].mxu0
        %v389 = vadd.f32 0.0, %v388
        %v390 = vpop.f32.mrb[0].mxu0
        %v391 = vpop.f32.mrb[0].mxu0
        %v392 = vadd.f32 0.0, %v391
        %v393 = vpop.f32.mrb[0].mxu0
        %394 = vmatprep.mubr.bf16.mxu0 0
        %395 = vmatmul.mubr.bf16.gmra.mrb[0].mxu0 %v284
        %v396 = vpop.f32.mrb[0].mxu0
        %v397 = vadd.f32 0.0, %v396
        %v398 = vpop.f32.mrb[0].mxu0
        %v399 = vpop.f32.mrb[0].mxu0
        %v400 = vadd.f32 0.0, %v399
        %v401 = vpop.f32.mrb[0].mxu0
        %402 = vmatprep.mubr.bf16.mxu0 0
        %403 = vmatmul.mubr.bf16.gmra.mrb[0].mxu0 %v285
        %v404 = vpop.f32.mrb[0].mxu0
        %v405 = vadd.f32 0.0, %v404
        %v406 = vpop.f32.mrb[0].mxu0
        %v407 = vpop.f32.mrb[0].mxu0
        %v408 = vadd.f32 0.0, %v407
        %v409 = vpop.f32.mrb[0].mxu0
        %410 = vmatprep.mubr.bf16.mxu0 0
        %411 = vmatmul.mubr.bf16.gmra.mrb[0].mxu0 %v286
        %v412 = vpop.f32.mrb[0].mxu0
        %v413 = vadd.f32 0.0, %v412
        %v414 = vpop.f32.mrb[0].mxu0
        %v415 = vpop.f32.mrb[0].mxu0
        %v416 = vadd.f32 0.0, %v415
        %v417 = vpop.f32.mrb[0].mxu0
        %418 = vmatprep.mubr.bf16.mxu0 0
        %419 = vmatmul.mubr.bf16.gmra.mrb[0].mxu0 %v287
        %v420 = vpop.f32.mrb[0].mxu0
        %v421 = vadd.f32 0.0, %v420
        %v422 = vpop.f32.mrb[0].mxu0
        %v423 = vpop.f32.mrb[0].mxu0
        %v424 = vadd.f32 0.0, %v423
        %v425 = vpop.f32.mrb[0].mxu0
        %426 = vmatprep.mubr.bf16.mxu0 0
        %427 = vmatmul.mubr.bf16.gmra.mrb[0].mxu0 %v288
        %v428 = vpop.f32.mrb[0].mxu0
        %v429 = vadd.f32 0.0, %v428
        %v430 = vpop.f32.mrb[0].mxu0
        %v431 = vpop.f32.mrb[0].mxu0
        %v432 = vadd.f32 0.0, %v431
        %v433 = vpop.f32.mrb[0].mxu0
        %434 = vmatprep.mubr.bf16.mxu0 0
        %435 = vmatmul.mubr.bf16.gmra.mrb[0].mxu0 %v289
        %v436 = vpop.f32.mrb[0].mxu0
        %v437 = vadd.f32 0.0, %v436
        %v438 = vpop.f32.mrb[0].mxu0
        %v439 = vpop.f32.mrb[0].mxu0
        %v440 = vadd.f32 0.0, %v439
        %v441 = vpop.f32.mrb[0].mxu0
        %442 = vdwg.mxu0
        %443 = vst [vmem:[#allocation2] sm:$0xff] %v381
        %444 = vst [vmem:[#allocation2 + $0x8] sm:$0xff] %v384
        %445 = vst [vmem:[#allocation2 + $0x10] sm:$0xff] %v389
        %446 = vst [vmem:[#allocation2 + $0x18] sm:$0xff] %v392
        %447 = vst [vmem:[#allocation2 + $0x20] sm:$0xff] %v397
        %448 = vst [vmem:[#allocation2 + $0x28] sm:$0xff] %v400
        %449 = vst [vmem:[#allocation2 + $0x30] sm:$0xff] %v405
        %450 = vst [vmem:[#allocation2 + $0x38] sm:$0xff] %v408
        %451 = vst [vmem:[#allocation2 + $0x40] sm:$0xff] %v413
        %452 = vst [vmem:[#allocation2 + $0x48] sm:$0xff] %v416
        %453 = vst [vmem:[#allocation2 + $0x50] sm:$0xff] %v421
        %454 = vst [vmem:[#allocation2 + $0x58] sm:$0xff] %v424
        %455 = vst [vmem:[#allocation2 + $0x60] sm:$0xff] %v429
        %456 = vst [vmem:[#allocation2 + $0x68] sm:$0xff] %v432
        %457 = vst [vmem:[#allocation2 + $0x70] sm:$0xff] %v437
        %458 = vst [vmem:[#allocation2 + $0x78] sm:$0xff] %v440
        %v459 = vld [vmem:[%s210] sm:$0xf]
        %v460 = vld [vmem:[%s210 + $0x4] sm:$0xf]
        %v461 = vld [vmem:[%s210 + $0x8] sm:$0xf]
        %v462 = vld [vmem:[%s210 + $0xc] sm:$0xf]
        %v463 = vld [vmem:[%s210 + $0x10] sm:$0xf]
        %v464 = vld [vmem:[%s210 + $0x14] sm:$0xf]
        %v465 = vld [vmem:[%s210 + $0x18] sm:$0xf]
        %v466 = vld [vmem:[%s210 + $0x1c] sm:$0xf]
        %v467 = vld [vmem:[%s210 + $0x20] sm:$0xf]
        %v468 = vld [vmem:[%s210 + $0x24] sm:$0xf]
        %v469 = vld [vmem:[%s210 + $0x28] sm:$0xf]
        %v470 = vld [vmem:[%s210 + $0x2c] sm:$0xf]
        %v471 = vld [vmem:[%s210 + $0x30] sm:$0xf]
        %v472 = vld [vmem:[%s210 + $0x34] sm:$0xf]
        %v473 = vld [vmem:[%s210 + $0x38] sm:$0xf]
        %v474 = vld [vmem:[%s1] sm:$0xf]
        %v475 = vld [vmem:[%s1 + $0x4] sm:$0xf]
        %v476 = vld [vmem:[%s1 + $0x8] sm:$0xf]
        %v477 = vld [vmem:[%s1 + $0xc] sm:$0xf]
        %v478 = vld [vmem:[%s1 + $0x10] sm:$0xf]
        %v479 = vld [vmem:[%s1 + $0x14] sm:$0xf]
        %v480 = vld [vmem:[%s1 + $0x18] sm:$0xf]
        %v481 = vld [vmem:[%s1 + $0x1c] sm:$0xf]
        %v482 = vld [vmem:[%s1 + $0x20] sm:$0xf]
        %v483 = vld [vmem:[%s1 + $0x24] sm:$0xf]
        %v484 = vld [vmem:[%s1 + $0x28] sm:$0xf]
        %v485 = vld [vmem:[%s1 + $0x2c] sm:$0xf]
        %v486 = vld [vmem:[%s1 + $0x30] sm:$0xf]
        %v487 = vld [vmem:[%s1 + $0x34] sm:$0xf]
        %v488 = vld [vmem:[%s1 + $0x38] sm:$0xf]
        %v489 = vld [vmem:[%s1 + $0x3c] sm:$0xf]
        %v505 = vunpack.c.l.b16 %v459
        %v506 = vunpack.c.l.b16 %v460
        %v507 = vunpack.c.l.b16 %v461
        %v508 = vunpack.c.l.b16 %v462
        %v509 = vunpack.c.l.b16 %v463
        %v510 = vunpack.c.l.b16 %v464
        %v511 = vunpack.c.l.b16 %v465
        %v512 = vunpack.c.l.b16 %v466
        %v513 = vunpack.c.l.b16 %v467
        %v514 = vunpack.c.l.b16 %v468
        %v515 = vunpack.c.l.b16 %v469
        %v516 = vunpack.c.l.b16 %v470
        %v517 = vunpack.c.l.b16 %v471
        %v518 = vunpack.c.l.b16 %v472
        %v519 = vunpack.c.l.b16 %v473
        %v520 = vpack.c.b16 %v506, %v505
        %v521 = vpack.c.b16 %v508, %v507
        %v522 = vpack.c.b16 %v510, %v509
        %v523 = vpack.c.b16 %v512, %v511
        %v524 = vpack.c.b16 %v514, %v513
        %v525 = vpack.c.b16 %v516, %v515
        %v526 = vpack.c.b16 %v518, %v517
        %v527 = vpack.c.b16 %v519, %v519
        %v552 = vunpack.c.l.b16 %v474
        %v553 = vunpack.c.l.b16 %v475
        %v554 = vunpack.c.l.b16 %v476
        %v555 = vunpack.c.l.b16 %v477
        %v556 = vunpack.c.l.b16 %v478
        %v557 = vunpack.c.l.b16 %v479
        %v558 = vunpack.c.l.b16 %v480
        %v559 = vunpack.c.l.b16 %v481
        %v560 = vunpack.c.l.b16 %v482
        %v561 = vunpack.c.l.b16 %v483
        %v562 = vunpack.c.l.b16 %v484
        %v563 = vunpack.c.l.b16 %v485
        %v564 = vunpack.c.l.b16 %v486
        %v565 = vunpack.c.l.b16 %v487
        %v566 = vunpack.c.l.b16 %v488
        %v567 = vunpack.c.l.b16 %v489
        %v568 = vpack.c.b16 %v553, %v552
        %v569 = vpack.c.b16 %v555, %v554
        %v570 = vpack.c.b16 %v557, %v556
        %v571 = vpack.c.b16 %v559, %v558
        %v572 = vpack.c.b16 %v561, %v560
        %v573 = vpack.c.b16 %v563, %v562
        %v574 = vpack.c.b16 %v565, %v564
        %v575 = vpack.c.b16 %v567, %v566
        %584 = vmatprep.subr.bf16.mxu0 0
        %585 = vmatpush1.bf16.msra.mxu0 %v568
        %586 = vmatprep.subr.bf16.mxu0 0
        %587 = vmatpush1.bf16.msra.mxu0 %v569
        %588 = vmatprep.subr.bf16.mxu0 0
        %589 = vmatpush1.bf16.msra.mxu0 %v570
        %590 = vmatprep.subr.bf16.mxu0 0
        %591 = vmatpush1.bf16.msra.mxu0 %v571
        %592 = vmatprep.subr.bf16.mxu0 0
        %593 = vmatpush1.bf16.msra.mxu0 %v572
        %594 = vmatprep.subr.bf16.mxu0 0
        %595 = vmatpush1.bf16.msra.mxu0 %v573
        %596 = vmatprep.subr.bf16.mxu0 0
        %597 = vmatpush1.bf16.msra.mxu0 %v574
        %598 = vmatprep.subr.bf16.mxu0 0
        %599 = vmatpush1.bf16.msra.mxu0 %v575
        %600 = vmatprep.subr.bf16.mxu0 0
        %601 = vmatpush1.bf16.msra.mxu0 0
        %602 = vmatprep.subr.bf16.mxu0 0
        %603 = vmatpush1.bf16.msra.mxu0 0
        %604 = vmatprep.subr.bf16.mxu0 0
        %605 = vmatpush1.bf16.msra.mxu0 0
        %606 = vmatprep.subr.bf16.mxu0 0
        %607 = vmatpush1.bf16.msra.mxu0 0
        %608 = vmatprep.subr.bf16.mxu0 0
        %609 = vmatpush1.bf16.msra.mxu0 0
        %610 = vmatprep.subr.bf16.mxu0 0
        %611 = vmatpush1.bf16.msra.mxu0 0
        %612 = vmatprep.subr.bf16.mxu0 0
        %613 = vmatpush1.bf16.msra.mxu0 0
        %614 = vmatprep.subr.bf16.mxu0 0
        %615 = vmatpush1.bf16.msra.mxu0 0
        %616 = vmatprep.mubr.bf16.mxu0 0
        %617 = vmatmul.mubr.bf16.gmra.mrb[0].mxu0 %v520
        %v618 = vpop.f32.mrb[0].mxu0
        %v619 = vadd.f32 0.0, %v618
        %v620 = vpop.f32.mrb[0].mxu0
        %v621 = vpop.f32.mrb[0].mxu0
        %v622 = vadd.f32 0.0, %v621
        %v623 = vpop.f32.mrb[0].mxu0
        %624 = vmatprep.mubr.bf16.mxu0 0
        %625 = vmatmul.mubr.bf16.gmra.mrb[0].mxu0 %v521
        %v626 = vpop.f32.mrb[0].mxu0
        %v627 = vadd.f32 0.0, %v626
        %v628 = vpop.f32.mrb[0].mxu0
        %v629 = vpop.f32.mrb[0].mxu0
        %v630 = vadd.f32 0.0, %v629
        %v631 = vpop.f32.mrb[0].mxu0
        %632 = vmatprep.mubr.bf16.mxu0 0
        %633 = vmatmul.mubr.bf16.gmra.mrb[0].mxu0 %v522
        %v634 = vpop.f32.mrb[0].mxu0
        %v635 = vadd.f32 0.0, %v634
        %v636 = vpop.f32.mrb[0].mxu0
        %v637 = vpop.f32.mrb[0].mxu0
        %v638 = vadd.f32 0.0, %v637
        %v639 = vpop.f32.mrb[0].mxu0
        %640 = vmatprep.mubr.bf16.mxu0 0
        %641 = vmatmul.mubr.bf16.gmra.mrb[0].mxu0 %v523
        %v642 = vpop.f32.mrb[0].mxu0
        %v643 = vadd.f32 0.0, %v642
        %v644 = vpop.f32.mrb[0].mxu0
        %v645 = vpop.f32.mrb[0].mxu0
        %v646 = vadd.f32 0.0, %v645
        %v647 = vpop.f32.mrb[0].mxu0
        %648 = vmatprep.mubr.bf16.mxu0 0
        %649 = vmatmul.mubr.bf16.gmra.mrb[0].mxu0 %v524
        %v650 = vpop.f32.mrb[0].mxu0
        %v651 = vadd.f32 0.0, %v650
        %v652 = vpop.f32.mrb[0].mxu0
        %v653 = vpop.f32.mrb[0].mxu0
        %v654 = vadd.f32 0.0, %v653
        %v655 = vpop.f32.mrb[0].mxu0
        %656 = vmatprep.mubr.bf16.mxu0 0
        %657 = vmatmul.mubr.bf16.gmra.mrb[0].mxu0 %v525
        %v658 = vpop.f32.mrb[0].mxu0
        %v659 = vadd.f32 0.0, %v658
        %v660 = vpop.f32.mrb[0].mxu0
        %v661 = vpop.f32.mrb[0].mxu0
        %v662 = vadd.f32 0.0, %v661
        %v663 = vpop.f32.mrb[0].mxu0
        %664 = vmatprep.mubr.bf16.mxu0 0
        %665 = vmatmul.mubr.bf16.gmra.mrb[0].mxu0 %v526
        %v666 = vpop.f32.mrb[0].mxu0
        %v667 = vadd.f32 0.0, %v666
        %v668 = vpop.f32.mrb[0].mxu0
        %v669 = vpop.f32.mrb[0].mxu0
        %v670 = vadd.f32 0.0, %v669
        %v671 = vpop.f32.mrb[0].mxu0
        %672 = vmatprep.mubr.bf16.mxu0 0
        %673 = vmatmul.mubr.bf16.gmra.mrb[0].mxu0 %v527
        %v674 = vpop.f32.mrb[0].mxu0
        %v675 = vadd.f32 0.0, %v674
        %v676 = vpop.f32.mrb[0].mxu0
        %v677 = vpop.f32.mrb[0].mxu0
        %v678 = vpop.f32.mrb[0].mxu0
        %679 = vdwg.mxu0
        %s680 = scalar_lea.vmem [#allocation2], 8
        %v681 = vld [vmem:[%s680] sm:$0xff]
        %v682 = vld [vmem:[%s680 + $0x8] sm:$0xff]
        %v683 = vld [vmem:[%s680 + $0x10] sm:$0xff]
        %v684 = vld [vmem:[%s680 + $0x18] sm:$0xff]
        %v685 = vld [vmem:[%s680 + $0x20] sm:$0xff]
        %v686 = vld [vmem:[%s680 + $0x28] sm:$0xff]
        %v687 = vld [vmem:[%s680 + $0x30] sm:$0xff]
        %v688 = vld [vmem:[%s680 + $0x38] sm:$0xff]
        %v689 = vld [vmem:[%s680 + $0x40] sm:$0xff]
        %v690 = vld [vmem:[%s680 + $0x48] sm:$0xff]
        %v691 = vld [vmem:[%s680 + $0x50] sm:$0xff]
        %v692 = vld [vmem:[%s680 + $0x58] sm:$0xff]
        %v693 = vld [vmem:[%s680 + $0x60] sm:$0xff]
        %v694 = vld [vmem:[%s680 + $0x68] sm:$0xff]
        %v695 = vld [vmem:[%s680 + $0x70] sm:$0xff]
        %v696 = vadd.f32 %v681, %v619
        %v697 = vadd.f32 %v682, %v622
        %v698 = vadd.f32 %v683, %v627
        %v699 = vadd.f32 %v684, %v630
        %v700 = vadd.f32 %v685, %v635
        %v701 = vadd.f32 %v686, %v638
        %v702 = vadd.f32 %v687, %v643
        %v703 = vadd.f32 %v688, %v646
        %v704 = vadd.f32 %v689, %v651
        %v705 = vadd.f32 %v690, %v654
        %v706 = vadd.f32 %v691, %v659
        %v707 = vadd.f32 %v692, %v662
        %v708 = vadd.f32 %v693, %v667
        %v709 = vadd.f32 %v694, %v670
        %v710 = vadd.f32 %v695, %v675
        %711 = vst [vmem:[%s680] sm:$0xff] %v696
        %712 = vst [vmem:[%s680 + $0x8] sm:$0xff] %v697
        %713 = vst [vmem:[%s680 + $0x10] sm:$0xff] %v698
        %714 = vst [vmem:[%s680 + $0x18] sm:$0xff] %v699
        %715 = vst [vmem:[%s680 + $0x20] sm:$0xff] %v700
        %716 = vst [vmem:[%s680 + $0x28] sm:$0xff] %v701
        %717 = vst [vmem:[%s680 + $0x30] sm:$0xff] %v702
        %718 = vst [vmem:[%s680 + $0x38] sm:$0xff] %v703
        %719 = vst [vmem:[%s680 + $0x40] sm:$0xff] %v704
        %720 = vst [vmem:[%s680 + $0x48] sm:$0xff] %v705
        %721 = vst [vmem:[%s680 + $0x50] sm:$0xff] %v706
        %722 = vst [vmem:[%s680 + $0x58] sm:$0xff] %v707
        %723 = vst [vmem:[%s680 + $0x60] sm:$0xff] %v708
        %724 = vst [vmem:[%s680 + $0x68] sm:$0xff] %v709
        %725 = vst [vmem:[%s680 + $0x70] sm:$0xff] %v710
        %s726 = scalar_lea.vmem %s210, 4
        %v727 = vld [vmem:[%s726] sm:$0xf]
        %v728 = vld [vmem:[%s726 + $0x4] sm:$0xf]
        %v729 = vld [vmem:[%s726 + $0x8] sm:$0xf]
        %v730 = vld [vmem:[%s726 + $0xc] sm:$0xf]
        %v731 = vld [vmem:[%s726 + $0x10] sm:$0xf]
        %v732 = vld [vmem:[%s726 + $0x14] sm:$0xf]
        %v733 = vld [vmem:[%s726 + $0x18] sm:$0xf]
        %v734 = vld [vmem:[%s726 + $0x1c] sm:$0xf]
        %v735 = vld [vmem:[%s726 + $0x20] sm:$0xf]
        %v736 = vld [vmem:[%s726 + $0x24] sm:$0xf]
        %v737 = vld [vmem:[%s726 + $0x28] sm:$0xf]
        %v738 = vld [vmem:[%s726 + $0x2c] sm:$0xf]
        %v739 = vld [vmem:[%s726 + $0x30] sm:$0xf]
        %v740 = vld [vmem:[%s726 + $0x34] sm:$0xf]
        %v741 = vld [vmem:[%s726 + $0x38] sm:$0xf]
        %s742 = scalar_lea.vmem %s1, 128
        %v743 = vld [vmem:[%s742] sm:$0xf]
        %v744 = vld [vmem:[%s742 + $0x4] sm:$0xf]
        %v745 = vld [vmem:[%s742 + $0x8] sm:$0xf]
        %v746 = vld [vmem:[%s742 + $0xc] sm:$0xf]
        %v747 = vld [vmem:[%s742 + $0x10] sm:$0xf]
        %v748 = vld [vmem:[%s742 + $0x14] sm:$0xf]
        %v749 = vld [vmem:[%s742 + $0x18] sm:$0xf]
        %v750 = vld [vmem:[%s742 + $0x1c] sm:$0xf]
        %v751 = vld [vmem:[%s742 + $0x20] sm:$0xf]
        %v752 = vld [vmem:[%s742 + $0x24] sm:$0xf]
        %v753 = vld [vmem:[%s742 + $0x28] sm:$0xf]
        %v754 = vld [vmem:[%s742 + $0x2c] sm:$0xf]
        %v755 = vld [vmem:[%s742 + $0x30] sm:$0xf]
        %v756 = vld [vmem:[%s742 + $0x34] sm:$0xf]
        %v757 = vld [vmem:[%s742 + $0x38] sm:$0xf]
        %v758 = vld [vmem:[%s742 + $0x3c] sm:$0xf]
        %v774 = vunpack.c.l.b16 %v727
        %v775 = vunpack.c.l.b16 %v728
        %v776 = vunpack.c.l.b16 %v729
        %v777 = vunpack.c.l.b16 %v730
        %v778 = vunpack.c.l.b16 %v731
        %v779 = vunpack.c.l.b16 %v732
        %v780 = vunpack.c.l.b16 %v733
        %v781 = vunpack.c.l.b16 %v734
        %v782 = vunpack.c.l.b16 %v735
        %v783 = vunpack.c.l.b16 %v736
        %v784 = vunpack.c.l.b16 %v737
        %v785 = vunpack.c.l.b16 %v738
        %v786 = vunpack.c.l.b16 %v739
        %v787 = vunpack.c.l.b16 %v740
        %v788 = vunpack.c.l.b16 %v741
        %v789 = vpack.c.b16 %v775, %v774
        %v790 = vpack.c.b16 %v777, %v776
        %v791 = vpack.c.b16 %v779, %v778
        %v792 = vpack.c.b16 %v781, %v780
        %v793 = vpack.c.b16 %v783, %v782
        %v794 = vpack.c.b16 %v785, %v784
        %v795 = vpack.c.b16 %v787, %v786
        %v796 = vpack.c.b16 %v788, %v788
        %v821 = vunpack.c.l.b16 %v743
        %v822 = vunpack.c.l.b16 %v744
        %v823 = vunpack.c.l.b16 %v745
        %v824 = vunpack.c.l.b16 %v746
        %v825 = vunpack.c.l.b16 %v747
        %v826 = vunpack.c.l.b16 %v748
        %v827 = vunpack.c.l.b16 %v749
        %v828 = vunpack.c.l.b16 %v750
        %v829 = vunpack.c.l.b16 %v751
        %v830 = vunpack.c.l.b16 %v752
        %v831 = vunpack.c.l.b16 %v753
        %v832 = vunpack.c.l.b16 %v754
        %v833 = vunpack.c.l.b16 %v755
        %v834 = vunpack.c.l.b16 %v756
        %v835 = vunpack.c.l.b16 %v757
        %v836 = vunpack.c.l.b16 %v758
        %v837 = vpack.c.b16 %v822, %v821
        %v838 = vpack.c.b16 %v824, %v823
        %v839 = vpack.c.b16 %v826, %v825
        %v840 = vpack.c.b16 %v828, %v827
        %v841 = vpack.c.b16 %v830, %v829
        %v842 = vpack.c.b16 %v832, %v831
        %v843 = vpack.c.b16 %v834, %v833
        %v844 = vpack.c.b16 %v836, %v835
        %853 = vmatprep.subr.bf16.mxu0 0
        %854 = vmatpush1.bf16.msra.mxu0 %v837
        %855 = vmatprep.subr.bf16.mxu0 0
        %856 = vmatpush1.bf16.msra.mxu0 %v838
        %857 = vmatprep.subr.bf16.mxu0 0
        %858 = vmatpush1.bf16.msra.mxu0 %v839
        %859 = vmatprep.subr.bf16.mxu0 0
        %860 = vmatpush1.bf16.msra.mxu0 %v840
        %861 = vmatprep.subr.bf16.mxu0 0
        %862 = vmatpush1.bf16.msra.mxu0 %v841
        %863 = vmatprep.subr.bf16.mxu0 0
        %864 = vmatpush1.bf16.msra.mxu0 %v842
        %865 = vmatprep.subr.bf16.mxu0 0
        %866 = vmatpush1.bf16.msra.mxu0 %v843
        %867 = vmatprep.subr.bf16.mxu0 0
        %868 = vmatpush1.bf16.msra.mxu0 %v844
        %869 = vmatprep.subr.bf16.mxu0 0
        %870 = vmatpush1.bf16.msra.mxu0 0
        %871 = vmatprep.subr.bf16.mxu0 0
        %872 = vmatpush1.bf16.msra.mxu0 0
        %873 = vmatprep.subr.bf16.mxu0 0
        %874 = vmatpush1.bf16.msra.mxu0 0
        %875 = vmatprep.subr.bf16.mxu0 0
        %876 = vmatpush1.bf16.msra.mxu0 0
        %877 = vmatprep.subr.bf16.mxu0 0
        %878 = vmatpush1.bf16.msra.mxu0 0
        %879 = vmatprep.subr.bf16.mxu0 0
        %880 = vmatpush1.bf16.msra.mxu0 0
        %881 = vmatprep.subr.bf16.mxu0 0
        %882 = vmatpush1.bf16.msra.mxu0 0
        %883 = vmatprep.subr.bf16.mxu0 0
        %884 = vmatpush1.bf16.msra.mxu0 0
        %885 = vmatprep.mubr.bf16.mxu0 0
        %886 = vmatmul.mubr.bf16.gmra.mrb[0].mxu0 %v789
        %v887 = vpop.f32.mrb[0].mxu0
        %v888 = vadd.f32 0.0, %v887
        %v889 = vpop.f32.mrb[0].mxu0
        %v890 = vpop.f32.mrb[0].mxu0
        %v891 = vadd.f32 0.0, %v890
        %v892 = vpop.f32.mrb[0].mxu0
        %893 = vmatprep.mubr.bf16.mxu0 0
        %894 = vmatmul.mubr.bf16.gmra.mrb[0].mxu0 %v790
        %v895 = vpop.f32.mrb[0].mxu0
        %v896 = vadd.f32 0.0, %v895
        %v897 = vpop.f32.mrb[0].mxu0
        %v898 = vpop.f32.mrb[0].mxu0
        %v899 = vadd.f32 0.0, %v898
        %v900 = vpop.f32.mrb[0].mxu0
        %901 = vmatprep.mubr.bf16.mxu0 0
        %902 = vmatmul.mubr.bf16.gmra.mrb[0].mxu0 %v791
        %v903 = vpop.f32.mrb[0].mxu0
        %v904 = vadd.f32 0.0, %v903
        %v905 = vpop.f32.mrb[0].mxu0
        %v906 = vpop.f32.mrb[0].mxu0
        %v907 = vadd.f32 0.0, %v906
        %v908 = vpop.f32.mrb[0].mxu0
        %909 = vmatprep.mubr.bf16.mxu0 0
        %910 = vmatmul.mubr.bf16.gmra.mrb[0].mxu0 %v792
        %v911 = vpop.f32.mrb[0].mxu0
        %v912 = vadd.f32 0.0, %v911
        %v913 = vpop.f32.mrb[0].mxu0
        %v914 = vpop.f32.mrb[0].mxu0
        %v915 = vadd.f32 0.0, %v914
        %v916 = vpop.f32.mrb[0].mxu0
        %917 = vmatprep.mubr.bf16.mxu0 0
        %918 = vmatmul.mubr.bf16.gmra.mrb[0].mxu0 %v793
        %v919 = vpop.f32.mrb[0].mxu0
        %v920 = vadd.f32 0.0, %v919
        %v921 = vpop.f32.mrb[0].mxu0
        %v922 = vpop.f32.mrb[0].mxu0
        %v923 = vadd.f32 0.0, %v922
        %v924 = vpop.f32.mrb[0].mxu0
        %925 = vmatprep.mubr.bf16.mxu0 0
        %926 = vmatmul.mubr.bf16.gmra.mrb[0].mxu0 %v794
        %v927 = vpop.f32.mrb[0].mxu0
        %v928 = vadd.f32 0.0, %v927
        %v929 = vpop.f32.mrb[0].mxu0
        %v930 = vpop.f32.mrb[0].mxu0
        %v931 = vadd.f32 0.0, %v930
        %v932 = vpop.f32.mrb[0].mxu0
        %933 = vmatprep.mubr.bf16.mxu0 0
        %934 = vmatmul.mubr.bf16.gmra.mrb[0].mxu0 %v795
        %v935 = vpop.f32.mrb[0].mxu0
        %v936 = vadd.f32 0.0, %v935
        %v937 = vpop.f32.mrb[0].mxu0
        %v938 = vpop.f32.mrb[0].mxu0
        %v939 = vadd.f32 0.0, %v938
        %v940 = vpop.f32.mrb[0].mxu0
        %941 = vmatprep.mubr.bf16.mxu0 0
        %942 = vmatmul.mubr.bf16.gmra.mrb[0].mxu0 %v796
        %v943 = vpop.f32.mrb[0].mxu0
        %v944 = vadd.f32 0.0, %v943
        %v945 = vpop.f32.mrb[0].mxu0
        %v946 = vpop.f32.mrb[0].mxu0
        %v947 = vpop.f32.mrb[0].mxu0
        %948 = vdwg.mxu0
        %v949 = vld [vmem:[#allocation2] sm:$0xff]
        %v950 = vld [vmem:[#allocation2 + $0x8] sm:$0xff]
        %v951 = vld [vmem:[#allocation2 + $0x10] sm:$0xff]
        %v952 = vld [vmem:[#allocation2 + $0x18] sm:$0xff]
        %v953 = vld [vmem:[#allocation2 + $0x20] sm:$0xff]
        %v954 = vld [vmem:[#allocation2 + $0x28] sm:$0xff]
        %v955 = vld [vmem:[#allocation2 + $0x30] sm:$0xff]
        %v956 = vld [vmem:[#allocation2 + $0x38] sm:$0xff]
        %v957 = vld [vmem:[#allocation2 + $0x40] sm:$0xff]
        %v958 = vld [vmem:[#allocation2 + $0x48] sm:$0xff]
        %v959 = vld [vmem:[#allocation2 + $0x50] sm:$0xff]
        %v960 = vld [vmem:[#allocation2 + $0x58] sm:$0xff]
        %v961 = vld [vmem:[#allocation2 + $0x60] sm:$0xff]
        %v962 = vld [vmem:[#allocation2 + $0x68] sm:$0xff]
        %v963 = vld [vmem:[#allocation2 + $0x70] sm:$0xff]
        %v964 = vadd.f32 %v949, %v888
        %v965 = vadd.f32 %v950, %v891
        %v966 = vadd.f32 %v951, %v896
        %v967 = vadd.f32 %v952, %v899
        %v968 = vadd.f32 %v953, %v904
        %v969 = vadd.f32 %v954, %v907
        %v970 = vadd.f32 %v955, %v912
        %v971 = vadd.f32 %v956, %v915
        %v972 = vadd.f32 %v957, %v920
        %v973 = vadd.f32 %v958, %v923
        %v974 = vadd.f32 %v959, %v928
        %v975 = vadd.f32 %v960, %v931
        %v976 = vadd.f32 %v961, %v936
        %v977 = vadd.f32 %v962, %v939
        %v978 = vadd.f32 %v963, %v944
        %979 = vst [vmem:[#allocation2] sm:$0xff] %v964
        %980 = vst [vmem:[#allocation2 + $0x8] sm:$0xff] %v965
        %981 = vst [vmem:[#allocation2 + $0x10] sm:$0xff] %v966
        %982 = vst [vmem:[#allocation2 + $0x18] sm:$0xff] %v967
        %983 = vst [vmem:[#allocation2 + $0x20] sm:$0xff] %v968
        %984 = vst [vmem:[#allocation2 + $0x28] sm:$0xff] %v969
        %985 = vst [vmem:[#allocation2 + $0x30] sm:$0xff] %v970
        %986 = vst [vmem:[#allocation2 + $0x38] sm:$0xff] %v971
        %987 = vst [vmem:[#allocation2 + $0x40] sm:$0xff] %v972
        %988 = vst [vmem:[#allocation2 + $0x48] sm:$0xff] %v973
        %989 = vst [vmem:[#allocation2 + $0x50] sm:$0xff] %v974
        %990 = vst [vmem:[#allocation2 + $0x58] sm:$0xff] %v975
        %991 = vst [vmem:[#allocation2 + $0x60] sm:$0xff] %v976
        %992 = vst [vmem:[#allocation2 + $0x68] sm:$0xff] %v977
        %993 = vst [vmem:[#allocation2 + $0x70] sm:$0xff] %v978
        %v994 = vld [vmem:[#allocation2] sm:$0xff]
        %v995 = vld [vmem:[#allocation2 + $0x8] sm:$0xff]
        %v996 = vld [vmem:[#allocation2 + $0x10] sm:$0xff]
        %v997 = vld [vmem:[#allocation2 + $0x18] sm:$0xff]
        %v998 = vld [vmem:[#allocation2 + $0x20] sm:$0xff]
        %v999 = vld [vmem:[#allocation2 + $0x28] sm:$0xff]
        %v1000 = vld [vmem:[#allocation2 + $0x30] sm:$0xff]
        %v1001 = vld [vmem:[#allocation2 + $0x38] sm:$0xff]
        %v1002 = vld [vmem:[#allocation2 + $0x40] sm:$0xff]
        %v1003 = vld [vmem:[#allocation2 + $0x48] sm:$0xff]
        %v1004 = vld [vmem:[#allocation2 + $0x50] sm:$0xff]
        %v1005 = vld [vmem:[#allocation2 + $0x58] sm:$0xff]
        %v1006 = vld [vmem:[#allocation2 + $0x60] sm:$0xff]
        %v1007 = vld [vmem:[#allocation2 + $0x68] sm:$0xff]
        %v1008 = vld [vmem:[#allocation2 + $0x70] sm:$0xff]
        %v1009 = vld [vmem:[#allocation2 + $0x78] sm:$0xff]
        %v1010 = vld [vmem:[%s2] sm:$0x1]
        %v1012 = vlaneseq
        %v1013 = vshrl.u32 %v1012, 7
        %v1014 = vsub.s32 0, %v1013
        %v1015 = vrot.slane %v1010, %v1014
        %v1017 = vadd.f32 %v994, %v1015
        %v1018 = vadd.f32 %v995, %v1015
        %v1019 = vadd.f32 %v996, %v1015
        %v1020 = vadd.f32 %v997, %v1015
        %v1021 = vadd.f32 %v998, %v1015
        %v1022 = vadd.f32 %v999, %v1015
        %v1023 = vadd.f32 %v1000, %v1015
        %v1024 = vadd.f32 %v1001, %v1015
        %v1025 = vadd.f32 %v1002, %v1015
        %v1026 = vadd.f32 %v1003, %v1015
        %v1027 = vadd.f32 %v1004, %v1015
        %v1028 = vadd.f32 %v1005, %v1015
        %v1029 = vadd.f32 %v1006, %v1015
        %v1030 = vadd.f32 %v1007, %v1015
        %v1031 = vadd.f32 %v1008, %v1015
        %v1032 = vadd.f32 %v1009, %v1015
        %v1033 = vld [vmem:[%s215] sm:$0xf]
        %v1034 = vld [vmem:[%s215 + $0x4] sm:$0xf]
        %v1035 = vld [vmem:[%s215 + $0x8] sm:$0xf]
        %v1036 = vld [vmem:[%s215 + $0xc] sm:$0xf]
        %v1037 = vld [vmem:[%s215 + $0x10] sm:$0xf]
        %v1038 = vld [vmem:[%s215 + $0x14] sm:$0xf]
        %v1039 = vld [vmem:[%s215 + $0x18] sm:$0xf]
        %v1040 = vld [vmem:[%s215 + $0x1c] sm:$0xf]
        %v1041 = vld [vmem:[%s215 + $0x20] sm:$0xf]
        %v1042 = vld [vmem:[%s215 + $0x24] sm:$0xf]
        %v1043 = vld [vmem:[%s215 + $0x28] sm:$0xf]
        %v1044 = vld [vmem:[%s215 + $0x2c] sm:$0xf]
        %v1045 = vld [vmem:[%s215 + $0x30] sm:$0xf]
        %v1046 = vld [vmem:[%s215 + $0x34] sm:$0xf]
        %v1047 = vld [vmem:[%s215 + $0x38] sm:$0xf]
        %v1048 = vld [vmem:[%s215 + $0x3c] sm:$0xf]
        %v1049 = vunpack.c.l.bf16 %v1033
        %v1050 = vunpack.c.l.bf16 %v1034
        %v1051 = vunpack.c.l.bf16 %v1035
        %v1052 = vunpack.c.l.bf16 %v1036
        %v1053 = vunpack.c.l.bf16 %v1037
        %v1054 = vunpack.c.l.bf16 %v1038
        %v1055 = vunpack.c.l.bf16 %v1039
        %v1056 = vunpack.c.l.bf16 %v1040
        %v1057 = vunpack.c.l.bf16 %v1041
        %v1058 = vunpack.c.l.bf16 %v1042
        %v1059 = vunpack.c.l.bf16 %v1043
        %v1060 = vunpack.c.l.bf16 %v1044
        %v1061 = vunpack.c.l.bf16 %v1045
        %v1062 = vunpack.c.l.bf16 %v1046
        %v1063 = vunpack.c.l.bf16 %v1047
        %v1064 = vunpack.c.l.bf16 %v1048
        %v1065 = vadd.f32 %v1017, %v1049
        %v1066 = vadd.f32 %v1018, %v1050
        %v1067 = vadd.f32 %v1019, %v1051
        %v1068 = vadd.f32 %v1020, %v1052
        %v1069 = vadd.f32 %v1021, %v1053
        %v1070 = vadd.f32 %v1022, %v1054
        %v1071 = vadd.f32 %v1023, %v1055
        %v1072 = vadd.f32 %v1024, %v1056
        %v1073 = vadd.f32 %v1025, %v1057
        %v1074 = vadd.f32 %v1026, %v1058
        %v1075 = vadd.f32 %v1027, %v1059
        %v1076 = vadd.f32 %v1028, %v1060
        %v1077 = vadd.f32 %v1029, %v1061
        %v1078 = vadd.f32 %v1030, %v1062
        %v1079 = vadd.f32 %v1031, %v1063
        %v1080 = vadd.f32 %v1032, %v1064
        %v1081 = vld [vmem:[%s210] sm:$0xf]
        %v1082 = vld [vmem:[%s210 + $0x4] sm:$0xf]
        %v1083 = vld [vmem:[%s210 + $0x8] sm:$0xf]
        %v1084 = vld [vmem:[%s210 + $0xc] sm:$0xf]
        %v1085 = vld [vmem:[%s210 + $0x10] sm:$0xf]
        %v1086 = vld [vmem:[%s210 + $0x14] sm:$0xf]
        %v1087 = vld [vmem:[%s210 + $0x18] sm:$0xf]
        %v1088 = vld [vmem:[%s210 + $0x1c] sm:$0xf]
        %v1089 = vld [vmem:[%s210 + $0x20] sm:$0xf]
        %v1090 = vld [vmem:[%s210 + $0x24] sm:$0xf]
        %v1091 = vld [vmem:[%s210 + $0x28] sm:$0xf]
        %v1092 = vld [vmem:[%s210 + $0x2c] sm:$0xf]
        %v1093 = vld [vmem:[%s210 + $0x30] sm:$0xf]
        %v1094 = vld [vmem:[%s210 + $0x34] sm:$0xf]
        %v1095 = vld [vmem:[%s210 + $0x38] sm:$0xf]
        %v1096 = vld [vmem:[%s210 + $0x3c] sm:$0xf]
        %v1097 = vunpack.c.l.bf16 %v1081
        %v1098 = vunpack.c.l.bf16 %v1082
        %v1099 = vunpack.c.l.bf16 %v1083
        %v1100 = vunpack.c.l.bf16 %v1084
        %v1101 = vunpack.c.l.bf16 %v1085
        %v1102 = vunpack.c.l.bf16 %v1086
        %v1103 = vunpack.c.l.bf16 %v1087
        %v1104 = vunpack.c.l.bf16 %v1088
        %v1105 = vunpack.c.l.bf16 %v1089
        %v1106 = vunpack.c.l.bf16 %v1090
        %v1107 = vunpack.c.l.bf16 %v1091
        %v1108 = vunpack.c.l.bf16 %v1092
        %v1109 = vunpack.c.l.bf16 %v1093
        %v1110 = vunpack.c.l.bf16 %v1094
        %v1111 = vunpack.c.l.bf16 %v1095
        %v1112 = vunpack.c.l.bf16 %v1096
        %v1113 = vadd.f32 %v1065, %v1097
        %v1114 = vadd.f32 %v1066, %v1098
        %v1115 = vadd.f32 %v1067, %v1099
        %v1116 = vadd.f32 %v1068, %v1100
        %v1117 = vadd.f32 %v1069, %v1101
        %v1118 = vadd.f32 %v1070, %v1102
        %v1119 = vadd.f32 %v1071, %v1103
        %v1120 = vadd.f32 %v1072, %v1104
        %v1121 = vadd.f32 %v1073, %v1105
        %v1122 = vadd.f32 %v1074, %v1106
        %v1123 = vadd.f32 %v1075, %v1107
        %v1124 = vadd.f32 %v1076, %v1108
        %v1125 = vadd.f32 %v1077, %v1109
        %v1126 = vadd.f32 %v1078, %v1110
        %v1127 = vadd.f32 %v1079, %v1111
        %v1128 = vadd.f32 %v1080, %v1112
        %v1129 = vmax.f32 %v1113, 0.0
        %v1130 = vmax.f32 %v1114, 0.0
        %v1131 = vmax.f32 %v1115, 0.0
        %v1132 = vmax.f32 %v1116, 0.0
        %v1133 = vmax.f32 %v1117, 0.0
        %v1134 = vmax.f32 %v1118, 0.0
        %v1135 = vmax.f32 %v1119, 0.0
        %v1136 = vmax.f32 %v1120, 0.0
        %v1137 = vmax.f32 %v1121, 0.0
        %v1138 = vmax.f32 %v1122, 0.0
        %v1139 = vmax.f32 %v1123, 0.0
        %v1140 = vmax.f32 %v1124, 0.0
        %v1141 = vmax.f32 %v1125, 0.0
        %v1142 = vmax.f32 %v1126, 0.0
        %v1143 = vmax.f32 %v1127, 0.0
        %v1144 = vmax.f32 %v1128, 0.0
        %1145 = vst [vmem:[%s205] sm:$0xff] %v1129
        %1146 = vst [vmem:[%s205 + $0x8] sm:$0xff] %v1130
        %1147 = vst [vmem:[%s205 + $0x10] sm:$0xff] %v1131
        %1148 = vst [vmem:[%s205 + $0x18] sm:$0xff] %v1132
        %1149 = vst [vmem:[%s205 + $0x20] sm:$0xff] %v1133
        %1150 = vst [vmem:[%s205 + $0x28] sm:$0xff] %v1134
        %1151 = vst [vmem:[%s205 + $0x30] sm:$0xff] %v1135
        %1152 = vst [vmem:[%s205 + $0x38] sm:$0xff] %v1136
        %1153 = vst [vmem:[%s205 + $0x40] sm:$0xff] %v1137
        %1154 = vst [vmem:[%s205 + $0x48] sm:$0xff] %v1138
        %1155 = vst [vmem:[%s205 + $0x50] sm:$0xff] %v1139
        %1156 = vst [vmem:[%s205 + $0x58] sm:$0xff] %v1140
        %1157 = vst [vmem:[%s205 + $0x60] sm:$0xff] %v1141
        %1158 = vst [vmem:[%s205 + $0x68] sm:$0xff] %v1142
        %1159 = vst [vmem:[%s205 + $0x70] sm:$0xff] %v1143
        %1160 = vst [vmem:[%s205 + $0x78] sm:$0xff] %v1144
        %s1161 = sand.u32 %s120, 1
        %s1162 = scalar_lea.sflag [#allocation4], %s1161
        %s1163 = sand.u32 %s120, 1
        %s1164 = smul.addr %s1163, 128
        %s1165 = scalar_lea.vmem [#allocation3], %s1164
        // Predicated region
        $region37: #{temporal_basic_block.1} parent=35 // pred_check
          %p1166 = pneg %p130
        $region38: #{temporal_basic_block.1} parent=35 // pred_check_branch
          %1168 = sbr.rel (%p1166) target = $region40
        $region39: #{temporal_basic_block.1} parent=35 // pred_region
          %s1170 = ssub.s32 2048, 2048
          %1171 = vsyncadd %s1162, %s1170
          %s1172 = smul.addr %s18, 16
          %s1173 = smul.addr %s1172, 128
          %s1174 = scalar_lea.hbm %s4, %s1173
          %s1175 = sshll.u32 %s1165, 4
          %s1176 = int_to_ptr.vmem [resolvable:$true] %s1175
          %1181 = dma.vmem_to_hbm [thread:$0]  %s1176, 2048, %s1174, %s1162, 128, 128, 8
        $region40: #{temporal_basic_block.1} parent=35 // pred_fallthru
          _
      $region36: #{temporal_basic_block.1} parent=5 // pred_fallthru
        _
      %p1182 = scmp.le.s32.totalorder 2, %s13
      // Predicated region
      $region41: #{temporal_basic_block.1} parent=5 // pred_check
        %p1183 = pneg %p1182
      $region42: #{temporal_basic_block.1} parent=5 // pred_check_branch
        %1185 = sbr.rel (%p1183) target = $region44
      $region43: #{temporal_basic_block.1} parent=5 // pred_region
        %s1186 = ssub.s32 %s13, 2
        // Predicated region
        $region45: #{temporal_basic_block.1} parent=43 // pred_check
          %p1187 = pneg %p136
        $region46: #{temporal_basic_block.1} parent=43 // pred_check_branch
          %1189 = sbr.rel (%p1187) target = $region48
        $region47: #{temporal_basic_block.1} parent=43 // pred_region
          %s1190 = sand.u32 %s121, 1
          %s1191 = scalar_lea.sflag [#allocation4], %s1190
          %s1192 = sand.u32 %s121, 1
          %s1193 = smul.addr %s1192, 128
          %s1194 = scalar_lea.vmem [#allocation3], %s1193
          %1195 = dma.done %s1191, 2048
        $region48: #{temporal_basic_block.1} parent=43 // pred_fallthru
          _
      $region44: #{temporal_basic_block.1} parent=5 // pred_fallthru
        _
    $region6: #{temporal_basic_block.1} parent=1 // loop_footer
      %s17 = sadd.s32 1, %s13
    $region7: #{temporal_basic_block.1} parent=1 // loop_footer_branch
      %12 = sbr.rel target = $region3
    $region8: #{temporal_basic_block.1} parent=1 // loop_exit
      _
    %1196 = vsyncpa [#allocation4], 1
    %s1197 = scalar_lea.sflag [#allocation4], 1
    %1198 = vsyncpa %s1197, 1

</llo_original>
